<compile_context>
chip_gen: v7x
topology: tpu7x:2x2x1
jax: 0.10.0
libtpu: 0.0.40
codegen_flags: <defaults>
</compile_context>

<pallas_src>
import numpy as np
import jax
import jax.numpy as jnp
from jax import lax
from jax.experimental import pallas as pl
from jax.experimental.pallas import tpu as pltpu


# --------------------------------------------------------------------------
# Pallas kernel:
#   Msat = where(window, Ms1 * (sigmoid(rho) * beta + (1 - beta)), Ms0)
# --------------------------------------------------------------------------
def _make_msat_kernel(ms0, ms1, beta, row0, row1, col0, col1, tile_rows, width):
    ms0 = np.float32(ms0)
    ms1 = np.float32(ms1)
    beta_f = np.float32(beta)
    one_minus_beta = np.float32(1.0 - beta)

    def kernel(rho_ref, out_ref):
        base = pl.program_id(0) * tile_rows
        rows = base + lax.broadcasted_iota(jnp.int32, (tile_rows, width), 0)
        cols = lax.broadcasted_iota(jnp.int32, (tile_rows, width), 1)
        inside = (rows >= row0) & (rows < row1) & (cols >= col0) & (cols < col1)

        x = rho_ref[...]
        sig = 1.0 / (1.0 + jnp.exp(-x))                 # exp on the EUP slot
        val = ms1 * (sig * beta_f + one_minus_beta)
        out_ref[...] = jnp.where(inside, val, ms0)      # VPU select, lane-dense store

    return kernel


def _pick_row_tile(h, cap=128):
    """Largest multiple-of-8 divisor of h that is <= cap (fallback: full h)."""
    best = None
    for t in range(8, min(h, cap) + 1, 8):
        if h % t == 0:
            best = t
    return best if best is not None else h


def msat_forward(rho_full, ms0, ms1, beta, region):
    H, W = rho_full.shape
    row0, row1, col0, col1 = region
    tr = _pick_row_tile(H)
    spec = pl.BlockSpec((tr, W), lambda i: (i, 0))
    return pl.pallas_call(
        _make_msat_kernel(ms0, ms1, beta, row0, row1, col0, col1, tr, W),
        out_shape=jax.ShapeDtypeStruct((H, W), jnp.float32),
        grid=(H // tr,),
        in_specs=[spec],
        out_specs=spec,
        compiler_params=pltpu.CompilerParams(
            dimension_semantics=("parallel",)),
    )(rho_full)


# --------------------------------------------------------------------------
# Module port
# --------------------------------------------------------------------------
class WaveGeometryMsPallas:
    # Hardcoded window / parameter shape from the PyTorch module.
    ROW0, ROW1 = 60, 460
    COL0, COL1 = 120, 620
    RHO_SHAPE = (400, 500)

    def __init__(self, dim, d, Ms, B0, damping_with):
        self.dim = (int(dim[0]), int(dim[1]))
        assert self.dim[0] >= self.ROW1 and self.dim[1] >= self.COL1, \
            "dim must contain the hardcoded [60:460, 120:620] window"
        self.d = d
        self.B0 = float(B0)
        self.Ms = tuple(float(m) for m in Ms)
        self.damping_with = int(damping_with)
        self.beta = 1.0 - self.Ms[2] / self.Ms[1]

        # rho0: same sigmoid-table argmin as the torch __init__ (host-side, once).
        x = np.linspace(-10.0, 10.0, 2000, dtype=np.float32)
        sigm_Ms = (1.0 / (1.0 + np.exp(-x)) * self.beta
                   + (1.0 - self.beta)) * self.Ms[1]
        self.rho0 = float(x[np.argmin(np.abs(sigm_Ms - self.Ms[0]))])

        # Parameter / buffers (kept as plain JAX attributes).
        self.rho = jnp.full(self.RHO_SHAPE, self.rho0, jnp.float32)
        self.Msat = jnp.zeros(self.dim, jnp.float32)
        self.Msat0 = jnp.full(self.dim, self.Ms[0], jnp.float32)
        self.B = jnp.zeros((3,) + self.dim, jnp.float32).at[2].set(self.B0)

    def __call__(self):
        H, W = self.dim
        # Glue: embed rho into the full grid at its fixed (60, 120) offset.  The
        # offset is not (8,128)-aligned, so it cannot be expressed as a BlockSpec
        # halo; the pad value is irrelevant because outside-window elements are
        # masked inside the kernel.
        # TODO(synk): if rho's placement ever becomes tile-aligned, feed rho
        # directly via a BlockSpec index_map and drop this pad pass.
        rho_full = jnp.pad(
            self.rho,
            ((self.ROW0, H - self.ROW1), (self.COL0, W - self.COL1)),
            mode="constant", constant_values=0.0)

        msat = msat_forward(rho_full, self.Ms[0], self.Ms[1], self.beta,
                            (self.ROW0, self.ROW1, self.COL0, self.COL1))
        self.Msat = msat
        return msat


if __name__ == "__main__":
    # Smallest (8,128)-aligned grid containing the hardcoded [60:460,120:620]
    # window (the window / rho shape are fixed by the PyTorch module).
    dim = (480, 640)
    Ms = (120e3, 140e3, 70e3)          # -> beta = 0.5, rho0 ~ 0.92 (nontrivial)

    geom = WaveGeometryMsPallas(dim=dim, d=(50e-9, 50e-9, 20e-9), Ms=Ms,
                                B0=60e-3, damping_with=20)

    # Deterministic example "trained" rho: rho0 plus small noise.
    key = jax.random.PRNGKey(0)
    geom.rho = geom.rho + 0.5 * jax.random.normal(key, geom.RHO_SHAPE, jnp.float32)

    msat = geom()
    jax.block_until_ready(msat)

    # Pure-JAX reference of the torch forward.
    beta = geom.beta
    region = geom.Ms[1] * (jax.nn.sigmoid(geom.rho) * beta + (1.0 - beta))
    ref = jnp.full(dim, geom.Ms[0], jnp.float32).at[
        geom.ROW0:geom.ROW1, geom.COL0:geom.COL1].set(region)

    assert msat.shape == dim and msat.dtype == jnp.float32
    max_rel_err = float(jnp.max(jnp.abs(msat - ref)) / geom.Ms[1])
    assert max_rel_err < 1e-4, max_rel_err
    print("KERNEL_OK")
</pallas_src>

<mosaic_0001>
module attributes {stable_mosaic.version = 11 : i64} {
  func.func @kernel(%arg0: i32, %arg1: memref<120x640xf32, #tpu.memory_space<vmem>>, %arg2: memref<120x640xf32, #tpu.memory_space<vmem>>) attributes {dimension_semantics = [#tpu.dimension_semantics<parallel>], iteration_bounds = array<i64: 4>, scalar_prefetch = 0 : i64, scratch_operands = 0 : i64, tpu.core_type = #tpu.core_type<tc>, window_params = [{transform_indices = @transform_0, window_bounds = array<i64: 120, 640>}, {transform_indices = @transform_1, window_bounds = array<i64: 120, 640>}]} {
    %c120_i32 = arith.constant 120 : i32
    %0 = arith.muli %arg0, %c120_i32 : i32
    %1 = tpu.iota {dimensions = array<i32: 0>} : vector<120x640xi32>
    %2 = vector.broadcast %0 : i32 to vector<120x640xi32>
    %3 = arith.addi %2, %1 : vector<120x640xi32>
    %4 = tpu.iota {dimensions = array<i32: 1>} : vector<120x640xi32>
    %c60_i32 = arith.constant 60 : i32
    %5 = vector.broadcast %c60_i32 : i32 to vector<120x640xi32>
    %6 = arith.cmpi sge, %3, %5 : vector<120x640xi32>
    %c460_i32 = arith.constant 460 : i32
    %7 = vector.broadcast %c460_i32 : i32 to vector<120x640xi32>
    %8 = arith.cmpi slt, %3, %7 : vector<120x640xi32>
    %9 = arith.andi %6, %8 : vector<120x640xi1>
    %c120_i32_0 = arith.constant 120 : i32
    %10 = vector.broadcast %c120_i32_0 : i32 to vector<120x640xi32>
    %11 = arith.cmpi sge, %4, %10 : vector<120x640xi32>
    %12 = arith.andi %9, %11 : vector<120x640xi1>
    %c620_i32 = arith.constant 620 : i32
    %13 = vector.broadcast %c620_i32 : i32 to vector<120x640xi32>
    %14 = arith.cmpi slt, %4, %13 : vector<120x640xi32>
    %15 = arith.andi %12, %14 : vector<120x640xi1>
    %c0 = arith.constant 0 : index
    %c0_1 = arith.constant 0 : index
    %16 = vector.load %arg1[%c0, %c0_1] : memref<120x640xf32, #tpu.memory_space<vmem>>, vector<120x640xf32>
    %cst = arith.constant 0.000000e+00 : f32
    %17 = vector.broadcast %cst : f32 to vector<120x640xf32>
    %18 = arith.subf %17, %16 : vector<120x640xf32>
    %19 = math.exp %18 : vector<120x640xf32>
    %cst_2 = arith.constant 1.000000e+00 : f32
    %20 = vector.broadcast %cst_2 : f32 to vector<120x640xf32>
    %21 = arith.addf %20, %19 : vector<120x640xf32>
    %cst_3 = arith.constant 1.000000e+00 : f32
    %22 = vector.broadcast %cst_3 : f32 to vector<120x640xf32>
    %23 = arith.divf %22, %21 : vector<120x640xf32>
    %cst_4 = arith.constant 5.000000e-01 : f32
    %24 = vector.broadcast %cst_4 : f32 to vector<120x640xf32>
    %25 = arith.mulf %23, %24 : vector<120x640xf32>
    %cst_5 = arith.constant 5.000000e-01 : f32
    %26 = vector.broadcast %cst_5 : f32 to vector<120x640xf32>
    %27 = arith.addf %25, %26 : vector<120x640xf32>
    %cst_6 = arith.constant 1.400000e+05 : f32
    %28 = vector.broadcast %cst_6 : f32 to vector<120x640xf32>
    %29 = arith.mulf %28, %27 : vector<120x640xf32>
    %cst_7 = arith.constant 1.200000e+05 : f32
    %30 = vector.broadcast %cst_7 : f32 to vector<120x640xf32>
    %31 = arith.select %15, %29, %30 : vector<120x640xi1>, vector<120x640xf32>
    %c0_8 = arith.constant 0 : index
    %c0_9 = arith.constant 0 : index
    %32 = vector.load %arg2[%c0_8, %c0_9] : memref<120x640xf32, #tpu.memory_space<vmem>>, vector<120x640xf32>
    tpu.vector_store %arg2[%c0_8, %c0_9], %31 {strides = array<i32>} : memref<120x640xf32, #tpu.memory_space<vmem>>, vector<120x640xf32>,
    return
  }
  func.func @transform_0(%arg0: i32) -> (i32, i32) {
    %c0_i32 = arith.constant 0 : i32
    %c0_i32_0 = arith.constant 0 : i32
    return %arg0, %c0_i32 : i32, i32
  }
  func.func @transform_1(%arg0: i32) -> (i32, i32) {
    %c0_i32 = arith.constant 0 : i32
    %c0_i32_0 = arith.constant 0 : i32
    return %arg0, %c0_i32 : i32, i32
  }
}

</mosaic_0001>

<llo_original>
// kernel: tpu_custom_call.1
$region0: #{tpu_custom_call.1}
  #allocation0 [shape = 'u32[]', space=smem, size = 0x4, offset = 0x4, fixed_abs, tag = 'smem constant byte address 0x4 - core index']
  #allocation1 [shape = 'u32[144,128]{1,0:T(1,128)}', space=vmem, size = 0x12000, scoped, tag = 'internal scratch']
  %s0 = inlined_call_operand.hbm [shape: f32[480,640], index: 0, kind: input, shape index: {}]
  %s1 = inlined_call_operand.hbm [shape: f32[480,640], index: 1, kind: output, shape index: {}]
  %s2 = sld [smem:[#allocation0]]
  $region41: #{tpu_custom_call.1} parent=0
    _
  %s4 = ssub.s32 1, %s2
  %s5 = scalar_select 0, %s4, %s2
  $region1: #{tpu_custom_call.1} parent=0
    #allocation2 [shape = 'u8[614400]{0}', space=vmem, size = 0x96000, scoped, tag = 'input window, operand 0']
    #allocation3 [shape = 's32[2]{0}', space=sflag, size = 0x8, scoped, tag = 'scoped memory for tpu_custom_call.1']
    #allocation4 [shape = 's32[2]{0}', space=sflag, size = 0x8, scoped, tag = 'scoped memory for tpu_custom_call.1']
    #allocation5 [shape = 'u8[614400]{0}', space=vmem, size = 0x96000, scoped, tag = 'output window, operand 0']
    %6 = vsyncpa [#allocation3], 0
    %s7 = scalar_lea.sflag [#allocation3], 1
    %8 = vsyncpa %s7, 0
    %9 = vsyncpa [#allocation4], 0
    %s10 = scalar_lea.sflag [#allocation4], 1
    %11 = vsyncpa %s10, 0
    loop: start=0, step=1, limit=6
    $region2: #{tpu_custom_call.1} parent=1 // loop_pre_header
      _
    $region3: #{tpu_custom_call.1} parent=1 // loop_header
      %s13 = sphi 0, %s17
      %p14 = scmp.ge.s32.totalorder %s13, 6
      %s23 = sphi 0, %s25
      %s26 = sphi 0, %s23
      %s27 = sphi 0, %s26
      %s43 = sphi 0, %s27
      %s49 = sphi 0, %s51
      %s52 = sphi 0, %s49
      %s53 = sphi 0, %s52
      %s69 = sphi 0, %s53
    $region4: #{tpu_custom_call.1} parent=1 // loop_header_branch
      %16 = sbr.rel (%p14) target = $region8
    $region5: #{tpu_custom_call.1} parent=1 // loop_body
      %s18 = ssub.s32 %s13, 1
      %s19 = ssub.s32 %s13, 2
      %s20 = sadd.s32 %s13, 1
      %s21 = ssub.s32 %s13, %s20
      %p22 = scmp.eq.s32.totalorder %s21, 0
      %s24 = sadd.s32 %s23, 1
      %s25 = scalar_select %p22, %s23, %s24
      %p28 = pneg %p22
      %p29 = scmp.eq.s32.totalorder %s13, 3
      %p30 = por %p28, %p29
      %p31 = scmp.ne.s32.totalorder %s23, %s26
      %p32 = scmp.eq.s32.totalorder %s13, 0
      %p33 = por %p31, %p32
      %p34 = scmp.ne.s32.totalorder %s23, %s26
      %p35 = scmp.eq.s32.totalorder %s18, 3
      %p36 = por %p34, %p35
      %p37 = scmp.ne.s32.totalorder %s26, %s27
      %p38 = scmp.eq.s32.totalorder %s18, 0
      %p39 = por %p37, %p38
      %p40 = scmp.ne.s32.totalorder %s26, %s27
      %p41 = scmp.eq.s32.totalorder %s19, 3
      %p42 = por %p40, %p41
      %p44 = scmp.ne.s32.totalorder %s27, %s43
      %p45 = scmp.eq.s32.totalorder %s19, 0
      %p46 = por %p44, %p45
      %s47 = ssub.s32 %s13, %s20
      %p48 = scmp.eq.s32.totalorder %s47, 0
      %s50 = sadd.s32 %s49, 1
      %s51 = scalar_select %p48, %s49, %s50
      %p54 = pneg %p48
      %p55 = scmp.eq.s32.totalorder %s13, 3
      %p56 = por %p54, %p55
      %p57 = scmp.ne.s32.totalorder %s49, %s52
      %p58 = scmp.eq.s32.totalorder %s13, 0
      %p59 = por %p57, %p58
      %p60 = scmp.ne.s32.totalorder %s49, %s52
      %p61 = scmp.eq.s32.totalorder %s18, 3
      %p62 = por %p60, %p61
      %p63 = scmp.ne.s32.totalorder %s52, %s53
      %p64 = scmp.eq.s32.totalorder %s18, 0
      %p65 = por %p63, %p64
      %p66 = scmp.ne.s32.totalorder %s52, %s53
      %p67 = scmp.eq.s32.totalorder %s19, 3
      %p68 = por %p66, %p67
      %p70 = scmp.ne.s32.totalorder %s53, %s69
      %p71 = scmp.eq.s32.totalorder %s19, 0
      %p72 = por %p70, %p71
      %p73 = scmp.le.s32.totalorder 1, %s13
      %p74 = scmp.lt.s32.totalorder %s13, 5
      %p75 = pnand %p73, %p74
      %p76 = pneg %p75
      // Predicated region
      $region9: #{tpu_custom_call.1} parent=5 // pred_check
        _
      $region10: #{tpu_custom_call.1} parent=5 // pred_check_branch
        %78 = sbr.rel (%p75) target = $region12
      $region11: #{tpu_custom_call.1} parent=5 // pred_region
        %s79 = ssub.s32 %s13, 1
      $region12: #{tpu_custom_call.1} parent=5 // pred_fallthru
        _
      %p80 = scmp.lt.s32.totalorder %s13, 4
      // Predicated region
      $region13: #{tpu_custom_call.1} parent=5 // pred_check
        %p81 = pneg %p80
      $region14: #{tpu_custom_call.1} parent=5 // pred_check_branch
        %83 = sbr.rel (%p81) target = $region16
      $region15: #{tpu_custom_call.1} parent=5 // pred_region
        // Predicated region
        $region17: #{tpu_custom_call.1} parent=15 // pred_check
          %p84 = pneg %p33
        $region18: #{tpu_custom_call.1} parent=15 // pred_check_branch
          %86 = sbr.rel (%p84) target = $region20
        $region19: #{tpu_custom_call.1} parent=15 // pred_region
          %s87 = sand.u32 %s23, 1
          %s88 = scalar_lea.sflag [#allocation3], %s87
          %s89 = sand.u32 %s23, 1
          %s90 = smul.addr %s89, 600
          %s91 = scalar_lea.vmem [#allocation2], %s90
          %s92 = smul.u32 15, %s13
          %s94 = ssub.s32 9600, 9600
          %95 = vsyncadd %s88, %s94
          %s96 = smul.addr %s92, 5
          %s97 = smul.addr %s96, 128
          %s98 = scalar_lea.hbm %s0, %s97
          %s99 = sshll.u32 %s91, 4
          %s100 = int_to_ptr.vmem [resolvable:$true] %s99
          %105 = dma.hbm_to_vmem [thread:$0]  %s98, 9600, %s100, %s88, 640, 640, 40
        $region20: #{tpu_custom_call.1} parent=15 // pred_fallthru
          _
      $region16: #{tpu_custom_call.1} parent=5 // pred_fallthru
        _
      %p106 = scmp.le.s32.totalorder 1, %s13
      %p107 = scmp.lt.s32.totalorder %s13, 5
      %p108 = pnand %p106, %p107
      %p109 = pneg %p108
      // Predicated region
      $region21: #{tpu_custom_call.1} parent=5 // pred_check
        _
      $region22: #{tpu_custom_call.1} parent=5 // pred_check_branch
        %111 = sbr.rel (%p108) target = $region24
      $region23: #{tpu_custom_call.1} parent=5 // pred_region
        %s112 = ssub.s32 %s13, 1
        %s113 = sand.u32 %s26, 1
        %s114 = scalar_lea.sflag [#allocation3], %s113
        %s115 = sand.u32 %s26, 1
        %s116 = smul.addr %s115, 600
        %s117 = scalar_lea.vmem [#allocation2], %s116
        // Predicated region
        $region25: #{tpu_custom_call.1} parent=23 // pred_check
          %p118 = pneg %p39
        $region26: #{tpu_custom_call.1} parent=23 // pred_check_branch
          %120 = sbr.rel (%p118) target = $region28
        $region27: #{tpu_custom_call.1} parent=23 // pred_region
          %121 = dma.done %s114, 9600
        $region28: #{tpu_custom_call.1} parent=23 // pred_fallthru
          _
        %s122 = sand.u32 %s26, 1
        %s123 = scalar_lea.sflag [#allocation3], %s122
        %s124 = sand.u32 %s26, 1
        %s125 = smul.addr %s124, 600
        %s126 = scalar_lea.vmem [#allocation2], %s125
        %p127 = pneg %p39
        %p128 = pneg %p36
        %p129 = pneg %p65
        %p130 = pneg %p62
        %s131 = sand.u32 %s52, 1
        %s132 = scalar_lea.sflag [#allocation4], %s131
        %s133 = sand.u32 %s52, 1
        %s134 = smul.addr %s133, 600
        %s135 = scalar_lea.vmem [#allocation5], %s134
        %s136 = smul.u32 15, %s18
        %s137 = smul.u32 15, %s18
        %s138 = smul.u32 %s18, 120
        %v139 = vlaneseq
        %v140 = vshrl.u32 %v139, 7
        %v141 = vadd.s32 %v140, 8
        %v142 = vadd.s32 %v140, 16
        %v143 = vadd.s32 %v140, 24
        %v144 = vadd.s32 %v140, 32
        %v145 = vadd.s32 %v140, 40
        %v146 = vadd.s32 %v140, 48
        %v147 = vadd.s32 %v140, 56
        %v148 = vadd.s32 %v140, 64
        %v149 = vadd.s32 %v140, 72
        %v150 = vadd.s32 %v140, 80
        %v151 = vadd.s32 %v140, 88
        %v152 = vadd.s32 %v140, 96
        %v153 = vadd.s32 %v140, 104
        %v154 = vadd.s32 %v140, 112
        %v155 = vstv %s138
        %v156 = vadd.s32 %v155, %v140
        %v157 = vadd.s32 %v155, %v141
        %v158 = vadd.s32 %v155, %v142
        %v159 = vadd.s32 %v155, %v143
        %v160 = vadd.s32 %v155, %v144
        %v161 = vadd.s32 %v155, %v145
        %v162 = vadd.s32 %v155, %v146
        %v163 = vadd.s32 %v155, %v147
        %v164 = vadd.s32 %v155, %v148
        %v165 = vadd.s32 %v155, %v149
        %v166 = vadd.s32 %v155, %v150
        %v167 = vadd.s32 %v155, %v151
        %v168 = vadd.s32 %v155, %v152
        %v169 = vadd.s32 %v155, %v153
        %v170 = vadd.s32 %v155, %v154
        %v171 = vlaneseq
        %v172 = vand.u32 %v171, 127
        %v173 = vadd.s32 %v172, 128
        %v174 = vadd.s32 %v172, 256
        %v175 = vadd.s32 %v172, 384
        %v176 = vadd.s32 %v172, 512
        %vm177 = vcmp.ge.s32.totalorder %v156, 60
        %vm178 = vcmp.ge.s32.totalorder %v157, 60
        %vm179 = vcmp.ge.s32.totalorder %v158, 60
        %vm180 = vcmp.ge.s32.totalorder %v159, 60
        %vm181 = vcmp.ge.s32.totalorder %v160, 60
        %vm182 = vcmp.ge.s32.totalorder %v161, 60
        %vm183 = vcmp.ge.s32.totalorder %v162, 60
        %vm184 = vcmp.ge.s32.totalorder %v163, 60
        %vm185 = vcmp.ge.s32.totalorder %v164, 60
        %vm186 = vcmp.ge.s32.totalorder %v165, 60
        %vm187 = vcmp.ge.s32.totalorder %v166, 60
        %vm188 = vcmp.ge.s32.totalorder %v167, 60
        %vm189 = vcmp.ge.s32.totalorder %v168, 60
        %vm190 = vcmp.ge.s32.totalorder %v169, 60
        %vm191 = vcmp.ge.s32.totalorder %v170, 60
        %vm192 = vcmp.lt.s32.totalorder %v156, 460
        %vm193 = vcmp.lt.s32.totalorder %v157, 460
        %vm194 = vcmp.lt.s32.totalorder %v158, 460
        %vm195 = vcmp.lt.s32.totalorder %v159, 460
        %vm196 = vcmp.lt.s32.totalorder %v160, 460
        %vm197 = vcmp.lt.s32.totalorder %v161, 460
        %vm198 = vcmp.lt.s32.totalorder %v162, 460
        %vm199 = vcmp.lt.s32.totalorder %v163, 460
        %vm200 = vcmp.lt.s32.totalorder %v164, 460
        %vm201 = vcmp.lt.s32.totalorder %v165, 460
        %vm202 = vcmp.lt.s32.totalorder %v166, 460
        %vm203 = vcmp.lt.s32.totalorder %v167, 460
        %vm204 = vcmp.lt.s32.totalorder %v168, 460
        %vm205 = vcmp.lt.s32.totalorder %v169, 460
        %vm206 = vcmp.lt.s32.totalorder %v170, 460
        %vm207 = vmand %vm177, %vm192
        %vm208 = vmand %vm178, %vm193
        %vm209 = vmand %vm179, %vm194
        %vm210 = vmand %vm180, %vm195
        %vm211 = vmand %vm181, %vm196
        %vm212 = vmand %vm182, %vm197
        %vm213 = vmand %vm183, %vm198
        %vm214 = vmand %vm184, %vm199
        %vm215 = vmand %vm185, %vm200
        %vm216 = vmand %vm186, %vm201
        %vm217 = vmand %vm187, %vm202
        %vm218 = vmand %vm188, %vm203
        %vm219 = vmand %vm189, %vm204
        %vm220 = vmand %vm190, %vm205
        %vm221 = vmand %vm191, %vm206
        %vm222 = vcmp.ge.s32.totalorder %v172, 120
        %vm223 = vcmp.ge.s32.totalorder %v173, 120
        %vm224 = vcmp.ge.s32.totalorder %v174, 120
        %vm225 = vcmp.ge.s32.totalorder %v175, 120
        %vm226 = vcmp.ge.s32.totalorder %v176, 120
        %vm227 = vmand %vm207, %vm222
        %vm228 = vmand %vm207, %vm223
        %vm229 = vmand %vm207, %vm224
        %vm230 = vmand %vm207, %vm225
        %vm231 = vmand %vm207, %vm226
        %vm232 = vmand %vm208, %vm222
        %vm233 = vmand %vm208, %vm223
        %vm234 = vmand %vm208, %vm224
        %vm235 = vmand %vm208, %vm225
        %vm236 = vmand %vm208, %vm226
        %vm237 = vmand %vm209, %vm222
        %vm238 = vmand %vm209, %vm223
        %vm239 = vmand %vm209, %vm224
        %vm240 = vmand %vm209, %vm225
        %vm241 = vmand %vm209, %vm226
        %vm242 = vmand %vm210, %vm222
        %vm243 = vmand %vm210, %vm223
        %vm244 = vmand %vm210, %vm224
        %vm245 = vmand %vm210, %vm225
        %vm246 = vmand %vm210, %vm226
        %vm247 = vmand %vm211, %vm222
        %vm248 = vmand %vm211, %vm223
        %vm249 = vmand %vm211, %vm224
        %vm250 = vmand %vm211, %vm225
        %vm251 = vmand %vm211, %vm226
        %vm252 = vmand %vm212, %vm222
        %vm253 = vmand %vm212, %vm223
        %vm254 = vmand %vm212, %vm224
        %vm255 = vmand %vm212, %vm225
        %vm256 = vmand %vm212, %vm226
        %vm257 = vmand %vm213, %vm222
        %vm258 = vmand %vm213, %vm223
        %vm259 = vmand %vm213, %vm224
        %vm260 = vmand %vm213, %vm225
        %vm261 = vmand %vm213, %vm226
        %vm262 = vmand %vm214, %vm222
        %vm263 = vmand %vm214, %vm223
        %vm264 = vmand %vm214, %vm224
        %vm265 = vmand %vm214, %vm225
        %vm266 = vmand %vm214, %vm226
        %vm267 = vmand %vm215, %vm222
        %vm268 = vmand %vm215, %vm223
        %vm269 = vmand %vm215, %vm224
        %vm270 = vmand %vm215, %vm225
        %vm271 = vmand %vm215, %vm226
        %vm272 = vmand %vm216, %vm222
        %vm273 = vmand %vm216, %vm223
        %vm274 = vmand %vm216, %vm224
        %vm275 = vmand %vm216, %vm225
        %vm276 = vmand %vm216, %vm226
        %vm277 = vmand %vm217, %vm222
        %vm278 = vmand %vm217, %vm223
        %vm279 = vmand %vm217, %vm224
        %vm280 = vmand %vm217, %vm225
        %vm281 = vmand %vm217, %vm226
        %vm282 = vmand %vm218, %vm222
        %vm283 = vmand %vm218, %vm223
        %vm284 = vmand %vm218, %vm224
        %vm285 = vmand %vm218, %vm225
        %vm286 = vmand %vm218, %vm226
        %vm287 = vmand %vm219, %vm222
        %vm288 = vmand %vm219, %vm223
        %vm289 = vmand %vm219, %vm224
        %vm290 = vmand %vm219, %vm225
        %vm291 = vmand %vm219, %vm226
        %vm292 = vmand %vm220, %vm222
        %vm293 = vmand %vm220, %vm223
        %vm294 = vmand %vm220, %vm224
        %vm295 = vmand %vm220, %vm225
        %vm296 = vmand %vm220, %vm226
        %vm297 = vmand %vm221, %vm222
        %vm298 = vmand %vm221, %vm223
        %vm299 = vmand %vm221, %vm224
        %vm300 = vmand %vm221, %vm225
        %vm301 = vmand %vm221, %vm226
        %vm302 = vcmp.lt.s32.totalorder %v172, 620
        %vm303 = vcmp.lt.s32.totalorder %v173, 620
        %vm304 = vcmp.lt.s32.totalorder %v174, 620
        %vm305 = vcmp.lt.s32.totalorder %v175, 620
        %vm306 = vcmp.lt.s32.totalorder %v176, 620
        %vm307 = vmand %vm227, %vm302
        %vm308 = vmand %vm228, %vm303
        %vm309 = vmand %vm229, %vm304
        %vm310 = vmand %vm230, %vm305
        %vm311 = vmand %vm231, %vm306
        %vm312 = vmand %vm232, %vm302
        %vm313 = vmand %vm233, %vm303
        %vm314 = vmand %vm234, %vm304
        %vm315 = vmand %vm235, %vm305
        %vm316 = vmand %vm236, %vm306
        %vm317 = vmand %vm237, %vm302
        %vm318 = vmand %vm238, %vm303
        %vm319 = vmand %vm239, %vm304
        %vm320 = vmand %vm240, %vm305
        %vm321 = vmand %vm241, %vm306
        %vm322 = vmand %vm242, %vm302
        %vm323 = vmand %vm243, %vm303
        %vm324 = vmand %vm244, %vm304
        %vm325 = vmand %vm245, %vm305
        %vm326 = vmand %vm246, %vm306
        %vm327 = vmand %vm247, %vm302
        %vm328 = vmand %vm248, %vm303
        %vm329 = vmand %vm249, %vm304
        %vm330 = vmand %vm250, %vm305
        %vm331 = vmand %vm251, %vm306
        %vm332 = vmand %vm252, %vm302
        %vm333 = vmand %vm253, %vm303
        %vm334 = vmand %vm254, %vm304
        %vm335 = vmand %vm255, %vm305
        %vm336 = vmand %vm256, %vm306
        %vm337 = vmand %vm257, %vm302
        %vm338 = vmand %vm258, %vm303
        %vm339 = vmand %vm259, %vm304
        %vm340 = vmand %vm260, %vm305
        %vm341 = vmand %vm261, %vm306
        %vm342 = vmand %vm262, %vm302
        %vm343 = vmand %vm263, %vm303
        %vm344 = vmand %vm264, %vm304
        %vm345 = vmand %vm265, %vm305
        %vm346 = vmand %vm266, %vm306
        %vm347 = vmand %vm267, %vm302
        %vm348 = vmand %vm268, %vm303
        %vm349 = vmand %vm269, %vm304
        %vm350 = vmand %vm270, %vm305
        %vm351 = vmand %vm271, %vm306
        %vm352 = vmand %vm272, %vm302
        %vm353 = vmand %vm273, %vm303
        %vm354 = vmand %vm274, %vm304
        %vm355 = vmand %vm275, %vm305
        %vm356 = vmand %vm276, %vm306
        %vm357 = vmand %vm277, %vm302
        %vm358 = vmand %vm278, %vm303
        %vm359 = vmand %vm279, %vm304
        %vm360 = vmand %vm280, %vm305
        %vm361 = vmand %vm281, %vm306
        %vm362 = vmand %vm282, %vm302
        %vm363 = vmand %vm283, %vm303
        %vm364 = vmand %vm284, %vm304
        %vm365 = vmand %vm285, %vm305
        %vm366 = vmand %vm286, %vm306
        %vm367 = vmand %vm287, %vm302
        %vm368 = vmand %vm288, %vm303
        %vm369 = vmand %vm289, %vm304
        %vm370 = vmand %vm290, %vm305
        %vm371 = vmand %vm291, %vm306
        %vm372 = vmand %vm292, %vm302
        %vm373 = vmand %vm293, %vm303
        %vm374 = vmand %vm294, %vm304
        %vm375 = vmand %vm295, %vm305
        %vm376 = vmand %vm296, %vm306
        %vm377 = vmand %vm297, %vm302
        %vm378 = vmand %vm298, %vm303
        %vm379 = vmand %vm299, %vm304
        %vm380 = vmand %vm300, %vm305
        %vm381 = vmand %vm301, %vm306
        %v382 = vld [vmem:[%s117] sm:$0xff]
        %v383 = vld [vmem:[%s117 + $0x8] sm:$0xff]
        %v384 = vld [vmem:[%s117 + $0x10] sm:$0xff]
        %v385 = vld [vmem:[%s117 + $0x18] sm:$0xff]
        %v386 = vld [vmem:[%s117 + $0x20] sm:$0xff]
        %v387 = vld [vmem:[%s117 + $0x28] sm:$0xff]
        %v388 = vld [vmem:[%s117 + $0x30] sm:$0xff]
        %v389 = vld [vmem:[%s117 + $0x38] sm:$0xff]
        %v390 = vld [vmem:[%s117 + $0x40] sm:$0xff]
        %v391 = vld [vmem:[%s117 + $0x48] sm:$0xff]
        %v392 = vld [vmem:[%s117 + $0x50] sm:$0xff]
        %v393 = vld [vmem:[%s117 + $0x58] sm:$0xff]
        %v394 = vld [vmem:[%s117 + $0x60] sm:$0xff]
        %v395 = vld [vmem:[%s117 + $0x68] sm:$0xff]
        %v396 = vld [vmem:[%s117 + $0x70] sm:$0xff]
        %v397 = vld [vmem:[%s117 + $0x78] sm:$0xff]
        %v398 = vld [vmem:[%s117 + $0x80] sm:$0xff]
        %v399 = vld [vmem:[%s117 + $0x88] sm:$0xff]
        %v400 = vld [vmem:[%s117 + $0x90] sm:$0xff]
        %v401 = vld [vmem:[%s117 + $0x98] sm:$0xff]
        %v402 = vld [vmem:[%s117 + $0xa0] sm:$0xff]
        %v403 = vld [vmem:[%s117 + $0xa8] sm:$0xff]
        %v404 = vld [vmem:[%s117 + $0xb0] sm:$0xff]
        %v405 = vld [vmem:[%s117 + $0xb8] sm:$0xff]
        %v406 = vld [vmem:[%s117 + $0xc0] sm:$0xff]
        %v407 = vld [vmem:[%s117 + $0xc8] sm:$0xff]
        %v408 = vld [vmem:[%s117 + $0xd0] sm:$0xff]
        %v409 = vld [vmem:[%s117 + $0xd8] sm:$0xff]
        %v410 = vld [vmem:[%s117 + $0xe0] sm:$0xff]
        %v411 = vld [vmem:[%s117 + $0xe8] sm:$0xff]
        %v412 = vld [vmem:[%s117 + $0xf0] sm:$0xff]
        %v413 = vld [vmem:[%s117 + $0xf8] sm:$0xff]
        %v414 = vld [vmem:[%s117 + $0x100] sm:$0xff]
        %v415 = vld [vmem:[%s117 + $0x108] sm:$0xff]
        %v416 = vld [vmem:[%s117 + $0x110] sm:$0xff]
        %v417 = vld [vmem:[%s117 + $0x118] sm:$0xff]
        %v418 = vld [vmem:[%s117 + $0x120] sm:$0xff]
        %v419 = vld [vmem:[%s117 + $0x128] sm:$0xff]
        %v420 = vld [vmem:[%s117 + $0x130] sm:$0xff]
        %v421 = vld [vmem:[%s117 + $0x138] sm:$0xff]
        %v422 = vld [vmem:[%s117 + $0x140] sm:$0xff]
        %v423 = vld [vmem:[%s117 + $0x148] sm:$0xff]
        %v424 = vld [vmem:[%s117 + $0x150] sm:$0xff]
        %v425 = vld [vmem:[%s117 + $0x158] sm:$0xff]
        %v426 = vld [vmem:[%s117 + $0x160] sm:$0xff]
        %v427 = vld [vmem:[%s117 + $0x168] sm:$0xff]
        %v428 = vld [vmem:[%s117 + $0x170] sm:$0xff]
        %v429 = vld [vmem:[%s117 + $0x178] sm:$0xff]
        %v430 = vld [vmem:[%s117 + $0x180] sm:$0xff]
        %v431 = vld [vmem:[%s117 + $0x188] sm:$0xff]
        %v432 = vld [vmem:[%s117 + $0x190] sm:$0xff]
        %v433 = vld [vmem:[%s117 + $0x198] sm:$0xff]
        %v434 = vld [vmem:[%s117 + $0x1a0] sm:$0xff]
        %v435 = vld [vmem:[%s117 + $0x1a8] sm:$0xff]
        %v436 = vld [vmem:[%s117 + $0x1b0] sm:$0xff]
        %v437 = vld [vmem:[%s117 + $0x1b8] sm:$0xff]
        %v438 = vld [vmem:[%s117 + $0x1c0] sm:$0xff]
        %v439 = vld [vmem:[%s117 + $0x1c8] sm:$0xff]
        %v440 = vld [vmem:[%s117 + $0x1d0] sm:$0xff]
        %v441 = vld [vmem:[%s117 + $0x1d8] sm:$0xff]
        %v442 = vld [vmem:[%s117 + $0x1e0] sm:$0xff]
        %v443 = vld [vmem:[%s117 + $0x1e8] sm:$0xff]
        %v444 = vld [vmem:[%s117 + $0x1f0] sm:$0xff]
        %v445 = vld [vmem:[%s117 + $0x1f8] sm:$0xff]
        %v446 = vld [vmem:[%s117 + $0x200] sm:$0xff]
        %v447 = vld [vmem:[%s117 + $0x208] sm:$0xff]
        %v448 = vld [vmem:[%s117 + $0x210] sm:$0xff]
        %v449 = vld [vmem:[%s117 + $0x218] sm:$0xff]
        %v450 = vld [vmem:[%s117 + $0x220] sm:$0xff]
        %v451 = vld [vmem:[%s117 + $0x228] sm:$0xff]
        %v452 = vld [vmem:[%s117 + $0x230] sm:$0xff]
        %v453 = vld [vmem:[%s117 + $0x238] sm:$0xff]
        %v454 = vld [vmem:[%s117 + $0x240] sm:$0xff]
        %v455 = vld [vmem:[%s117 + $0x248] sm:$0xff]
        %v456 = vld [vmem:[%s117 + $0x250] sm:$0xff]
        %v457 = vsub.f32 0.0, %v382
        %v458 = vsub.f32 0.0, %v383
        %v459 = vsub.f32 0.0, %v384
        %v460 = vsub.f32 0.0, %v385
        %v461 = vsub.f32 0.0, %v386
        %v462 = vsub.f32 0.0, %v387
        %v463 = vsub.f32 0.0, %v388
        %v464 = vsub.f32 0.0, %v389
        %v465 = vsub.f32 0.0, %v390
        %v466 = vsub.f32 0.0, %v391
        %v467 = vsub.f32 0.0, %v392
        %v468 = vsub.f32 0.0, %v393
        %v469 = vsub.f32 0.0, %v394
        %v470 = vsub.f32 0.0, %v395
        %v471 = vsub.f32 0.0, %v396
        %v472 = vsub.f32 0.0, %v397
        %v473 = vsub.f32 0.0, %v398
        %v474 = vsub.f32 0.0, %v399
        %v475 = vsub.f32 0.0, %v400
        %v476 = vsub.f32 0.0, %v401
        %v477 = vsub.f32 0.0, %v402
        %v478 = vsub.f32 0.0, %v403
        %v479 = vsub.f32 0.0, %v404
        %v480 = vsub.f32 0.0, %v405
        %v481 = vsub.f32 0.0, %v406
        %v482 = vsub.f32 0.0, %v407
        %v483 = vsub.f32 0.0, %v408
        %v484 = vsub.f32 0.0, %v409
        %v485 = vsub.f32 0.0, %v410
        %v486 = vsub.f32 0.0, %v411
        %v487 = vsub.f32 0.0, %v412
        %v488 = vsub.f32 0.0, %v413
        %v489 = vsub.f32 0.0, %v414
        %v490 = vsub.f32 0.0, %v415
        %v491 = vsub.f32 0.0, %v416
        %v492 = vsub.f32 0.0, %v417
        %v493 = vsub.f32 0.0, %v418
        %v494 = vsub.f32 0.0, %v419
        %v495 = vsub.f32 0.0, %v420
        %v496 = vsub.f32 0.0, %v421
        %v497 = vsub.f32 0.0, %v422
        %v498 = vsub.f32 0.0, %v423
        %v499 = vsub.f32 0.0, %v424
        %v500 = vsub.f32 0.0, %v425
        %v501 = vsub.f32 0.0, %v426
        %v502 = vsub.f32 0.0, %v427
        %v503 = vsub.f32 0.0, %v428
        %v504 = vsub.f32 0.0, %v429
        %v505 = vsub.f32 0.0, %v430
        %v506 = vsub.f32 0.0, %v431
        %v507 = vsub.f32 0.0, %v432
        %v508 = vsub.f32 0.0, %v433
        %v509 = vsub.f32 0.0, %v434
        %v510 = vsub.f32 0.0, %v435
        %v511 = vsub.f32 0.0, %v436
        %v512 = vsub.f32 0.0, %v437
        %v513 = vsub.f32 0.0, %v438
        %v514 = vsub.f32 0.0, %v439
        %v515 = vsub.f32 0.0, %v440
        %v516 = vsub.f32 0.0, %v441
        %v517 = vsub.f32 0.0, %v442
        %v518 = vsub.f32 0.0, %v443
        %v519 = vsub.f32 0.0, %v444
        %v520 = vsub.f32 0.0, %v445
        %v521 = vsub.f32 0.0, %v446
        %v522 = vsub.f32 0.0, %v447
        %v523 = vsub.f32 0.0, %v448
        %v524 = vsub.f32 0.0, %v449
        %v525 = vsub.f32 0.0, %v450
        %v526 = vsub.f32 0.0, %v451
        %v527 = vsub.f32 0.0, %v452
        %v528 = vsub.f32 0.0, %v453
        %v529 = vsub.f32 0.0, %v454
        %v530 = vsub.f32 0.0, %v455
        %v531 = vsub.f32 0.0, %v456
        %v532 = vmul.f32 %v457, 1.442695
        %v533 = vpow.pop %v532
        %v534 = vmul.f32 %v458, 1.442695
        %v535 = vpow.pop %v534
        %v536 = vmul.f32 %v459, 1.442695
        %v537 = vpow.pop %v536
        %v538 = vmul.f32 %v460, 1.442695
        %v539 = vpow.pop %v538
        %v540 = vmul.f32 %v461, 1.442695
        %v541 = vpow.pop %v540
        %v542 = vmul.f32 %v462, 1.442695
        %v543 = vpow.pop %v542
        %v544 = vmul.f32 %v463, 1.442695
        %v545 = vpow.pop %v544
        %v546 = vmul.f32 %v464, 1.442695
        %v547 = vpow.pop %v546
        %v548 = vmul.f32 %v465, 1.442695
        %v549 = vpow.pop %v548
        %v550 = vmul.f32 %v466, 1.442695
        %v551 = vpow.pop %v550
        %v552 = vmul.f32 %v467, 1.442695
        %v553 = vpow.pop %v552
        %v554 = vmul.f32 %v468, 1.442695
        %v555 = vpow.pop %v554
        %v556 = vmul.f32 %v469, 1.442695
        %v557 = vpow.pop %v556
        %v558 = vmul.f32 %v470, 1.442695
        %v559 = vpow.pop %v558
        %v560 = vmul.f32 %v471, 1.442695
        %v561 = vpow.pop %v560
        %v562 = vmul.f32 %v472, 1.442695
        %v563 = vpow.pop %v562
        %v564 = vmul.f32 %v473, 1.442695
        %v565 = vpow.pop %v564
        %v566 = vmul.f32 %v474, 1.442695
        %v567 = vpow.pop %v566
        %v568 = vmul.f32 %v475, 1.442695
        %v569 = vpow.pop %v568
        %v570 = vmul.f32 %v476, 1.442695
        %v571 = vpow.pop %v570
        %v572 = vmul.f32 %v477, 1.442695
        %v573 = vpow.pop %v572
        %v574 = vmul.f32 %v478, 1.442695
        %v575 = vpow.pop %v574
        %v576 = vmul.f32 %v479, 1.442695
        %v577 = vpow.pop %v576
        %v578 = vmul.f32 %v480, 1.442695
        %v579 = vpow.pop %v578
        %v580 = vmul.f32 %v481, 1.442695
        %v581 = vpow.pop %v580
        %v582 = vmul.f32 %v482, 1.442695
        %v583 = vpow.pop %v582
        %v584 = vmul.f32 %v483, 1.442695
        %v585 = vpow.pop %v584
        %v586 = vmul.f32 %v484, 1.442695
        %v587 = vpow.pop %v586
        %v588 = vmul.f32 %v485, 1.442695
        %v589 = vpow.pop %v588
        %v590 = vmul.f32 %v486, 1.442695
        %v591 = vpow.pop %v590
        %v592 = vmul.f32 %v487, 1.442695
        %v593 = vpow.pop %v592
        %v594 = vmul.f32 %v488, 1.442695
        %v595 = vpow.pop %v594
        %v596 = vmul.f32 %v489, 1.442695
        %v597 = vpow.pop %v596
        %v598 = vmul.f32 %v490, 1.442695
        %v599 = vpow.pop %v598
        %v600 = vmul.f32 %v491, 1.442695
        %v601 = vpow.pop %v600
        %v602 = vmul.f32 %v492, 1.442695
        %v603 = vpow.pop %v602
        %v604 = vmul.f32 %v493, 1.442695
        %v605 = vpow.pop %v604
        %v606 = vmul.f32 %v494, 1.442695
        %v607 = vpow.pop %v606
        %v608 = vmul.f32 %v495, 1.442695
        %v609 = vpow.pop %v608
        %v610 = vmul.f32 %v496, 1.442695
        %v611 = vpow.pop %v610
        %v612 = vmul.f32 %v497, 1.442695
        %v613 = vpow.pop %v612
        %v614 = vmul.f32 %v498, 1.442695
        %v615 = vpow.pop %v614
        %v616 = vmul.f32 %v499, 1.442695
        %v617 = vpow.pop %v616
        %v618 = vmul.f32 %v500, 1.442695
        %v619 = vpow.pop %v618
        %v620 = vmul.f32 %v501, 1.442695
        %v621 = vpow.pop %v620
        %v622 = vmul.f32 %v502, 1.442695
        %v623 = vpow.pop %v622
        %v624 = vmul.f32 %v503, 1.442695
        %v625 = vpow.pop %v624
        %v626 = vmul.f32 %v504, 1.442695
        %v627 = vpow.pop %v626
        %v628 = vmul.f32 %v505, 1.442695
        %v629 = vpow.pop %v628
        %v630 = vmul.f32 %v506, 1.442695
        %v631 = vpow.pop %v630
        %v632 = vmul.f32 %v507, 1.442695
        %v633 = vpow.pop %v632
        %v634 = vmul.f32 %v508, 1.442695
        %v635 = vpow.pop %v634
        %v636 = vmul.f32 %v509, 1.442695
        %v637 = vpow.pop %v636
        %v638 = vmul.f32 %v510, 1.442695
        %v639 = vpow.pop %v638
        %v640 = vmul.f32 %v511, 1.442695
        %v641 = vpow.pop %v640
        %v642 = vmul.f32 %v512, 1.442695
        %v643 = vpow.pop %v642
        %v644 = vmul.f32 %v513, 1.442695
        %v645 = vpow.pop %v644
        %v646 = vmul.f32 %v514, 1.442695
        %v647 = vpow.pop %v646
        %v648 = vmul.f32 %v515, 1.442695
        %v649 = vpow.pop %v648
        %v650 = vmul.f32 %v516, 1.442695
        %v651 = vpow.pop %v650
        %v652 = vmul.f32 %v517, 1.442695
        %v653 = vpow.pop %v652
        %v654 = vmul.f32 %v518, 1.442695
        %v655 = vpow.pop %v654
        %v656 = vmul.f32 %v519, 1.442695
        %v657 = vpow.pop %v656
        %v658 = vmul.f32 %v520, 1.442695
        %v659 = vpow.pop %v658
        %v660 = vmul.f32 %v521, 1.442695
        %v661 = vpow.pop %v660
        %v662 = vmul.f32 %v522, 1.442695
        %v663 = vpow.pop %v662
        %v664 = vmul.f32 %v523, 1.442695
        %v665 = vpow.pop %v664
        %v666 = vmul.f32 %v524, 1.442695
        %v667 = vpow.pop %v666
        %v668 = vmul.f32 %v525, 1.442695
        %v669 = vpow.pop %v668
        %v670 = vmul.f32 %v526, 1.442695
        %v671 = vpow.pop %v670
        %v672 = vmul.f32 %v527, 1.442695
        %v673 = vpow.pop %v672
        %v674 = vmul.f32 %v528, 1.442695
        %v675 = vpow.pop %v674
        %v676 = vmul.f32 %v529, 1.442695
        %v677 = vpow.pop %v676
        %v678 = vmul.f32 %v530, 1.442695
        %v679 = vpow.pop %v678
        %v680 = vmul.f32 %v531, 1.442695
        %v681 = vpow.pop %v680
        %v682 = vadd.f32 %v533, 1.0
        %v683 = vadd.f32 %v535, 1.0
        %v684 = vadd.f32 %v537, 1.0
        %v685 = vadd.f32 %v539, 1.0
        %v686 = vadd.f32 %v541, 1.0
        %v687 = vadd.f32 %v543, 1.0
        %v688 = vadd.f32 %v545, 1.0
        %v689 = vadd.f32 %v547, 1.0
        %v690 = vadd.f32 %v549, 1.0
        %v691 = vadd.f32 %v551, 1.0
        %v692 = vadd.f32 %v553, 1.0
        %v693 = vadd.f32 %v555, 1.0
        %v694 = vadd.f32 %v557, 1.0
        %v695 = vadd.f32 %v559, 1.0
        %v696 = vadd.f32 %v561, 1.0
        %v697 = vadd.f32 %v563, 1.0
        %v698 = vadd.f32 %v565, 1.0
        %v699 = vadd.f32 %v567, 1.0
        %v700 = vadd.f32 %v569, 1.0
        %v701 = vadd.f32 %v571, 1.0
        %v702 = vadd.f32 %v573, 1.0
        %v703 = vadd.f32 %v575, 1.0
        %v704 = vadd.f32 %v577, 1.0
        %v705 = vadd.f32 %v579, 1.0
        %v706 = vadd.f32 %v581, 1.0
        %v707 = vadd.f32 %v583, 1.0
        %v708 = vadd.f32 %v585, 1.0
        %v709 = vadd.f32 %v587, 1.0
        %v710 = vadd.f32 %v589, 1.0
        %v711 = vadd.f32 %v591, 1.0
        %v712 = vadd.f32 %v593, 1.0
        %v713 = vadd.f32 %v595, 1.0
        %v714 = vadd.f32 %v597, 1.0
        %v715 = vadd.f32 %v599, 1.0
        %v716 = vadd.f32 %v601, 1.0
        %v717 = vadd.f32 %v603, 1.0
        %v718 = vadd.f32 %v605, 1.0
        %v719 = vadd.f32 %v607, 1.0
        %v720 = vadd.f32 %v609, 1.0
        %v721 = vadd.f32 %v611, 1.0
        %v722 = vadd.f32 %v613, 1.0
        %v723 = vadd.f32 %v615, 1.0
        %v724 = vadd.f32 %v617, 1.0
        %v725 = vadd.f32 %v619, 1.0
        %v726 = vadd.f32 %v621, 1.0
        %v727 = vadd.f32 %v623, 1.0
        %v728 = vadd.f32 %v625, 1.0
        %v729 = vadd.f32 %v627, 1.0
        %v730 = vadd.f32 %v629, 1.0
        %v731 = vadd.f32 %v631, 1.0
        %v732 = vadd.f32 %v633, 1.0
        %v733 = vadd.f32 %v635, 1.0
        %v734 = vadd.f32 %v637, 1.0
        %v735 = vadd.f32 %v639, 1.0
        %v736 = vadd.f32 %v641, 1.0
        %v737 = vadd.f32 %v643, 1.0
        %v738 = vadd.f32 %v645, 1.0
        %v739 = vadd.f32 %v647, 1.0
        %v740 = vadd.f32 %v649, 1.0
        %v741 = vadd.f32 %v651, 1.0
        %v742 = vadd.f32 %v653, 1.0
        %v743 = vadd.f32 %v655, 1.0
        %v744 = vadd.f32 %v657, 1.0
        %v745 = vadd.f32 %v659, 1.0
        %v746 = vadd.f32 %v661, 1.0
        %v747 = vadd.f32 %v663, 1.0
        %v748 = vadd.f32 %v665, 1.0
        %v749 = vadd.f32 %v667, 1.0
        %v750 = vadd.f32 %v669, 1.0
        %v751 = vadd.f32 %v671, 1.0
        %v752 = vadd.f32 %v673, 1.0
        %v753 = vadd.f32 %v675, 1.0
        %v754 = vadd.f32 %v677, 1.0
        %v755 = vadd.f32 %v679, 1.0
        %v756 = vadd.f32 %v681, 1.0
        %v757 = vrcp.pop %v682
        %v758 = vmul.f32 1.0, %v757
        %v759 = vrcp.pop %v683
        %v760 = vmul.f32 1.0, %v759
        %v761 = vrcp.pop %v684
        %v762 = vmul.f32 1.0, %v761
        %v763 = vrcp.pop %v685
        %v764 = vmul.f32 1.0, %v763
        %v765 = vrcp.pop %v686
        %v766 = vmul.f32 1.0, %v765
        %v767 = vrcp.pop %v687
        %v768 = vmul.f32 1.0, %v767
        %v769 = vrcp.pop %v688
        %v770 = vmul.f32 1.0, %v769
        %v771 = vrcp.pop %v689
        %v772 = vmul.f32 1.0, %v771
        %v773 = vrcp.pop %v690
        %v774 = vmul.f32 1.0, %v773
        %v775 = vrcp.pop %v691
        %v776 = vmul.f32 1.0, %v775
        %v777 = vrcp.pop %v692
        %v778 = vmul.f32 1.0, %v777
        %v779 = vrcp.pop %v693
        %v780 = vmul.f32 1.0, %v779
        %v781 = vrcp.pop %v694
        %v782 = vmul.f32 1.0, %v781
        %v783 = vrcp.pop %v695
        %v784 = vmul.f32 1.0, %v783
        %v785 = vrcp.pop %v696
        %v786 = vmul.f32 1.0, %v785
        %v787 = vrcp.pop %v697
        %v788 = vmul.f32 1.0, %v787
        %v789 = vrcp.pop %v698
        %v790 = vmul.f32 1.0, %v789
        %v791 = vrcp.pop %v699
        %v792 = vmul.f32 1.0, %v791
        %v793 = vrcp.pop %v700
        %v794 = vmul.f32 1.0, %v793
        %v795 = vrcp.pop %v701
        %v796 = vmul.f32 1.0, %v795
        %v797 = vrcp.pop %v702
        %v798 = vmul.f32 1.0, %v797
        %v799 = vrcp.pop %v703
        %v800 = vmul.f32 1.0, %v799
        %v801 = vrcp.pop %v704
        %v802 = vmul.f32 1.0, %v801
        %v803 = vrcp.pop %v705
        %v804 = vmul.f32 1.0, %v803
        %v805 = vrcp.pop %v706
        %v806 = vmul.f32 1.0, %v805
        %v807 = vrcp.pop %v707
        %v808 = vmul.f32 1.0, %v807
        %v809 = vrcp.pop %v708
        %v810 = vmul.f32 1.0, %v809
        %v811 = vrcp.pop %v709
        %v812 = vmul.f32 1.0, %v811
        %v813 = vrcp.pop %v710
        %v814 = vmul.f32 1.0, %v813
        %v815 = vrcp.pop %v711
        %v816 = vmul.f32 1.0, %v815
        %v817 = vrcp.pop %v712
        %v818 = vmul.f32 1.0, %v817
        %v819 = vrcp.pop %v713
        %v820 = vmul.f32 1.0, %v819
        %v821 = vrcp.pop %v714
        %v822 = vmul.f32 1.0, %v821
        %v823 = vrcp.pop %v715
        %v824 = vmul.f32 1.0, %v823
        %v825 = vrcp.pop %v716
        %v826 = vmul.f32 1.0, %v825
        %v827 = vrcp.pop %v717
        %v828 = vmul.f32 1.0, %v827
        %v829 = vrcp.pop %v718
        %v830 = vmul.f32 1.0, %v829
        %v831 = vrcp.pop %v719
        %v832 = vmul.f32 1.0, %v831
        %v833 = vrcp.pop %v720
        %v834 = vmul.f32 1.0, %v833
        %v835 = vrcp.pop %v721
        %v836 = vmul.f32 1.0, %v835
        %v837 = vrcp.pop %v722
        %v838 = vmul.f32 1.0, %v837
        %v839 = vrcp.pop %v723
        %v840 = vmul.f32 1.0, %v839
        %v841 = vrcp.pop %v724
        %v842 = vmul.f32 1.0, %v841
        %v843 = vrcp.pop %v725
        %v844 = vmul.f32 1.0, %v843
        %v845 = vrcp.pop %v726
        %v846 = vmul.f32 1.0, %v845
        %v847 = vrcp.pop %v727
        %v848 = vmul.f32 1.0, %v847
        %v849 = vrcp.pop %v728
        %v850 = vmul.f32 1.0, %v849
        %v851 = vrcp.pop %v729
        %v852 = vmul.f32 1.0, %v851
        %v853 = vrcp.pop %v730
        %v854 = vmul.f32 1.0, %v853
        %v855 = vrcp.pop %v731
        %v856 = vmul.f32 1.0, %v855
        %v857 = vrcp.pop %v732
        %v858 = vmul.f32 1.0, %v857
        %v859 = vrcp.pop %v733
        %v860 = vmul.f32 1.0, %v859
        %v861 = vrcp.pop %v734
        %v862 = vmul.f32 1.0, %v861
        %v863 = vrcp.pop %v735
        %v864 = vmul.f32 1.0, %v863
        %v865 = vrcp.pop %v736
        %v866 = vmul.f32 1.0, %v865
        %v867 = vrcp.pop %v737
        %v868 = vmul.f32 1.0, %v867
        %v869 = vrcp.pop %v738
        %v870 = vmul.f32 1.0, %v869
        %v871 = vrcp.pop %v739
        %v872 = vmul.f32 1.0, %v871
        %v873 = vrcp.pop %v740
        %v874 = vmul.f32 1.0, %v873
        %v875 = vrcp.pop %v741
        %v876 = vmul.f32 1.0, %v875
        %v877 = vrcp.pop %v742
        %v878 = vmul.f32 1.0, %v877
        %v879 = vrcp.pop %v743
        %v880 = vmul.f32 1.0, %v879
        %v881 = vrcp.pop %v744
        %v882 = vmul.f32 1.0, %v881
        %v883 = vrcp.pop %v745
        %v884 = vmul.f32 1.0, %v883
        %v885 = vrcp.pop %v746
        %v886 = vmul.f32 1.0, %v885
        %v887 = vrcp.pop %v747
        %v888 = vmul.f32 1.0, %v887
        %v889 = vrcp.pop %v748
        %v890 = vmul.f32 1.0, %v889
        %v891 = vrcp.pop %v749
        %v892 = vmul.f32 1.0, %v891
        %v893 = vrcp.pop %v750
        %v894 = vmul.f32 1.0, %v893
        %v895 = vrcp.pop %v751
        %v896 = vmul.f32 1.0, %v895
        %v897 = vrcp.pop %v752
        %v898 = vmul.f32 1.0, %v897
        %v899 = vrcp.pop %v753
        %v900 = vmul.f32 1.0, %v899
        %v901 = vrcp.pop %v754
        %v902 = vmul.f32 1.0, %v901
        %v903 = vrcp.pop %v755
        %v904 = vmul.f32 1.0, %v903
        %v905 = vrcp.pop %v756
        %v906 = vmul.f32 1.0, %v905
        %v907 = vmul.f32 %v758, 0.5
        %v908 = vmul.f32 %v760, 0.5
        %v909 = vmul.f32 %v762, 0.5
        %v910 = vmul.f32 %v764, 0.5
        %v911 = vmul.f32 %v766, 0.5
        %v912 = vmul.f32 %v768, 0.5
        %v913 = vmul.f32 %v770, 0.5
        %v914 = vmul.f32 %v772, 0.5
        %v915 = vmul.f32 %v774, 0.5
        %v916 = vmul.f32 %v776, 0.5
        %v917 = vmul.f32 %v778, 0.5
        %v918 = vmul.f32 %v780, 0.5
        %v919 = vmul.f32 %v782, 0.5
        %v920 = vmul.f32 %v784, 0.5
        %v921 = vmul.f32 %v786, 0.5
        %v922 = vmul.f32 %v788, 0.5
        %v923 = vmul.f32 %v790, 0.5
        %v924 = vmul.f32 %v792, 0.5
        %v925 = vmul.f32 %v794, 0.5
        %v926 = vmul.f32 %v796, 0.5
        %v927 = vmul.f32 %v798, 0.5
        %v928 = vmul.f32 %v800, 0.5
        %v929 = vmul.f32 %v802, 0.5
        %v930 = vmul.f32 %v804, 0.5
        %v931 = vmul.f32 %v806, 0.5
        %v932 = vmul.f32 %v808, 0.5
        %v933 = vmul.f32 %v810, 0.5
        %v934 = vmul.f32 %v812, 0.5
        %v935 = vmul.f32 %v814, 0.5
        %v936 = vmul.f32 %v816, 0.5
        %v937 = vmul.f32 %v818, 0.5
        %v938 = vmul.f32 %v820, 0.5
        %v939 = vmul.f32 %v822, 0.5
        %v940 = vmul.f32 %v824, 0.5
        %v941 = vmul.f32 %v826, 0.5
        %v942 = vmul.f32 %v828, 0.5
        %v943 = vmul.f32 %v830, 0.5
        %v944 = vmul.f32 %v832, 0.5
        %v945 = vmul.f32 %v834, 0.5
        %v946 = vmul.f32 %v836, 0.5
        %v947 = vmul.f32 %v838, 0.5
        %v948 = vmul.f32 %v840, 0.5
        %v949 = vmul.f32 %v842, 0.5
        %v950 = vmul.f32 %v844, 0.5
        %v951 = vmul.f32 %v846, 0.5
        %v952 = vmul.f32 %v848, 0.5
        %v953 = vmul.f32 %v850, 0.5
        %v954 = vmul.f32 %v852, 0.5
        %v955 = vmul.f32 %v854, 0.5
        %v956 = vmul.f32 %v856, 0.5
        %v957 = vmul.f32 %v858, 0.5
        %v958 = vmul.f32 %v860, 0.5
        %v959 = vmul.f32 %v862, 0.5
        %v960 = vmul.f32 %v864, 0.5
        %v961 = vmul.f32 %v866, 0.5
        %v962 = vmul.f32 %v868, 0.5
        %v963 = vmul.f32 %v870, 0.5
        %v964 = vmul.f32 %v872, 0.5
        %v965 = vmul.f32 %v874, 0.5
        %v966 = vmul.f32 %v876, 0.5
        %v967 = vmul.f32 %v878, 0.5
        %v968 = vmul.f32 %v880, 0.5
        %v969 = vmul.f32 %v882, 0.5
        %v970 = vmul.f32 %v884, 0.5
        %v971 = vmul.f32 %v886, 0.5
        %v972 = vmul.f32 %v888, 0.5
        %v973 = vmul.f32 %v890, 0.5
        %v974 = vmul.f32 %v892, 0.5
        %v975 = vmul.f32 %v894, 0.5
        %v976 = vmul.f32 %v896, 0.5
        %v977 = vmul.f32 %v898, 0.5
        %v978 = vmul.f32 %v900, 0.5
        %v979 = vmul.f32 %v902, 0.5
        %v980 = vmul.f32 %v904, 0.5
        %v981 = vmul.f32 %v906, 0.5
        %v982 = vadd.f32 %v907, 0.5
        %v983 = vadd.f32 %v908, 0.5
        %v984 = vadd.f32 %v909, 0.5
        %v985 = vadd.f32 %v910, 0.5
        %v986 = vadd.f32 %v911, 0.5
        %v987 = vadd.f32 %v912, 0.5
        %v988 = vadd.f32 %v913, 0.5
        %v989 = vadd.f32 %v914, 0.5
        %v990 = vadd.f32 %v915, 0.5
        %v991 = vadd.f32 %v916, 0.5
        %v992 = vadd.f32 %v917, 0.5
        %v993 = vadd.f32 %v918, 0.5
        %v994 = vadd.f32 %v919, 0.5
        %v995 = vadd.f32 %v920, 0.5
        %v996 = vadd.f32 %v921, 0.5
        %v997 = vadd.f32 %v922, 0.5
        %v998 = vadd.f32 %v923, 0.5
        %v999 = vadd.f32 %v924, 0.5
        %v1000 = vadd.f32 %v925, 0.5
        %v1001 = vadd.f32 %v926, 0.5
        %v1002 = vadd.f32 %v927, 0.5
        %v1003 = vadd.f32 %v928, 0.5
        %v1004 = vadd.f32 %v929, 0.5
        %v1005 = vadd.f32 %v930, 0.5
        %v1006 = vadd.f32 %v931, 0.5
        %v1007 = vadd.f32 %v932, 0.5
        %v1008 = vadd.f32 %v933, 0.5
        %v1009 = vadd.f32 %v934, 0.5
        %v1010 = vadd.f32 %v935, 0.5
        %v1011 = vadd.f32 %v936, 0.5
        %v1012 = vadd.f32 %v937, 0.5
        %v1013 = vadd.f32 %v938, 0.5
        %v1014 = vadd.f32 %v939, 0.5
        %v1015 = vadd.f32 %v940, 0.5
        %v1016 = vadd.f32 %v941, 0.5
        %v1017 = vadd.f32 %v942, 0.5
        %v1018 = vadd.f32 %v943, 0.5
        %v1019 = vadd.f32 %v944, 0.5
        %v1020 = vadd.f32 %v945, 0.5
        %v1021 = vadd.f32 %v946, 0.5
        %v1022 = vadd.f32 %v947, 0.5
        %v1023 = vadd.f32 %v948, 0.5
        %v1024 = vadd.f32 %v949, 0.5
        %v1025 = vadd.f32 %v950, 0.5
        %v1026 = vadd.f32 %v951, 0.5
        %v1027 = vadd.f32 %v952, 0.5
        %v1028 = vadd.f32 %v953, 0.5
        %v1029 = vadd.f32 %v954, 0.5
        %v1030 = vadd.f32 %v955, 0.5
        %v1031 = vadd.f32 %v956, 0.5
        %v1032 = vadd.f32 %v957, 0.5
        %v1033 = vadd.f32 %v958, 0.5
        %v1034 = vadd.f32 %v959, 0.5
        %v1035 = vadd.f32 %v960, 0.5
        %v1036 = vadd.f32 %v961, 0.5
        %v1037 = vadd.f32 %v962, 0.5
        %v1038 = vadd.f32 %v963, 0.5
        %v1039 = vadd.f32 %v964, 0.5
        %v1040 = vadd.f32 %v965, 0.5
        %v1041 = vadd.f32 %v966, 0.5
        %v1042 = vadd.f32 %v967, 0.5
        %v1043 = vadd.f32 %v968, 0.5
        %v1044 = vadd.f32 %v969, 0.5
        %v1045 = vadd.f32 %v970, 0.5
        %v1046 = vadd.f32 %v971, 0.5
        %v1047 = vadd.f32 %v972, 0.5
        %v1048 = vadd.f32 %v973, 0.5
        %v1049 = vadd.f32 %v974, 0.5
        %v1050 = vadd.f32 %v975, 0.5
        %v1051 = vadd.f32 %v976, 0.5
        %v1052 = vadd.f32 %v977, 0.5
        %v1053 = vadd.f32 %v978, 0.5
        %v1054 = vadd.f32 %v979, 0.5
        %v1055 = vadd.f32 %v980, 0.5
        %v1056 = vadd.f32 %v981, 0.5
        %v1057 = vmul.f32 %v982, 140000.0
        %v1058 = vmul.f32 %v983, 140000.0
        %v1059 = vmul.f32 %v984, 140000.0
        %v1060 = vmul.f32 %v985, 140000.0
        %v1061 = vmul.f32 %v986, 140000.0
        %v1062 = vmul.f32 %v987, 140000.0
        %v1063 = vmul.f32 %v988, 140000.0
        %v1064 = vmul.f32 %v989, 140000.0
        %v1065 = vmul.f32 %v990, 140000.0
        %v1066 = vmul.f32 %v991, 140000.0
        %v1067 = vmul.f32 %v992, 140000.0
        %v1068 = vmul.f32 %v993, 140000.0
        %v1069 = vmul.f32 %v994, 140000.0
        %v1070 = vmul.f32 %v995, 140000.0
        %v1071 = vmul.f32 %v996, 140000.0
        %v1072 = vmul.f32 %v997, 140000.0
        %v1073 = vmul.f32 %v998, 140000.0
        %v1074 = vmul.f32 %v999, 140000.0
        %v1075 = vmul.f32 %v1000, 140000.0
        %v1076 = vmul.f32 %v1001, 140000.0
        %v1077 = vmul.f32 %v1002, 140000.0
        %v1078 = vmul.f32 %v1003, 140000.0
        %v1079 = vmul.f32 %v1004, 140000.0
        %v1080 = vmul.f32 %v1005, 140000.0
        %v1081 = vmul.f32 %v1006, 140000.0
        %v1082 = vmul.f32 %v1007, 140000.0
        %v1083 = vmul.f32 %v1008, 140000.0
        %v1084 = vmul.f32 %v1009, 140000.0
        %v1085 = vmul.f32 %v1010, 140000.0
        %v1086 = vmul.f32 %v1011, 140000.0
        %v1087 = vmul.f32 %v1012, 140000.0
        %v1088 = vmul.f32 %v1013, 140000.0
        %v1089 = vmul.f32 %v1014, 140000.0
        %v1090 = vmul.f32 %v1015, 140000.0
        %v1091 = vmul.f32 %v1016, 140000.0
        %v1092 = vmul.f32 %v1017, 140000.0
        %v1093 = vmul.f32 %v1018, 140000.0
        %v1094 = vmul.f32 %v1019, 140000.0
        %v1095 = vmul.f32 %v1020, 140000.0
        %v1096 = vmul.f32 %v1021, 140000.0
        %v1097 = vmul.f32 %v1022, 140000.0
        %v1098 = vmul.f32 %v1023, 140000.0
        %v1099 = vmul.f32 %v1024, 140000.0
        %v1100 = vmul.f32 %v1025, 140000.0
        %v1101 = vmul.f32 %v1026, 140000.0
        %v1102 = vmul.f32 %v1027, 140000.0
        %v1103 = vmul.f32 %v1028, 140000.0
        %v1104 = vmul.f32 %v1029, 140000.0
        %v1105 = vmul.f32 %v1030, 140000.0
        %v1106 = vmul.f32 %v1031, 140000.0
        %v1107 = vmul.f32 %v1032, 140000.0
        %v1108 = vmul.f32 %v1033, 140000.0
        %v1109 = vmul.f32 %v1034, 140000.0
        %v1110 = vmul.f32 %v1035, 140000.0
        %v1111 = vmul.f32 %v1036, 140000.0
        %v1112 = vmul.f32 %v1037, 140000.0
        %v1113 = vmul.f32 %v1038, 140000.0
        %v1114 = vmul.f32 %v1039, 140000.0
        %v1115 = vmul.f32 %v1040, 140000.0
        %v1116 = vmul.f32 %v1041, 140000.0
        %v1117 = vmul.f32 %v1042, 140000.0
        %v1118 = vmul.f32 %v1043, 140000.0
        %v1119 = vmul.f32 %v1044, 140000.0
        %v1120 = vmul.f32 %v1045, 140000.0
        %v1121 = vmul.f32 %v1046, 140000.0
        %v1122 = vmul.f32 %v1047, 140000.0
        %v1123 = vmul.f32 %v1048, 140000.0
        %v1124 = vmul.f32 %v1049, 140000.0
        %v1125 = vmul.f32 %v1050, 140000.0
        %v1126 = vmul.f32 %v1051, 140000.0
        %v1127 = vmul.f32 %v1052, 140000.0
        %v1128 = vmul.f32 %v1053, 140000.0
        %v1129 = vmul.f32 %v1054, 140000.0
        %v1130 = vmul.f32 %v1055, 140000.0
        %v1131 = vmul.f32 %v1056, 140000.0
        %v1132 = vsel %vm307, %v1057, 120000.0
        %v1133 = vsel %vm308, %v1058, 120000.0
        %v1134 = vsel %vm309, %v1059, 120000.0
        %v1135 = vsel %vm310, %v1060, 120000.0
        %v1136 = vsel %vm311, %v1061, 120000.0
        %v1137 = vsel %vm312, %v1062, 120000.0
        %v1138 = vsel %vm313, %v1063, 120000.0
        %v1139 = vsel %vm314, %v1064, 120000.0
        %v1140 = vsel %vm315, %v1065, 120000.0
        %v1141 = vsel %vm316, %v1066, 120000.0
        %v1142 = vsel %vm317, %v1067, 120000.0
        %v1143 = vsel %vm318, %v1068, 120000.0
        %v1144 = vsel %vm319, %v1069, 120000.0
        %v1145 = vsel %vm320, %v1070, 120000.0
        %v1146 = vsel %vm321, %v1071, 120000.0
        %v1147 = vsel %vm322, %v1072, 120000.0
        %v1148 = vsel %vm323, %v1073, 120000.0
        %v1149 = vsel %vm324, %v1074, 120000.0
        %v1150 = vsel %vm325, %v1075, 120000.0
        %v1151 = vsel %vm326, %v1076, 120000.0
        %v1152 = vsel %vm327, %v1077, 120000.0
        %v1153 = vsel %vm328, %v1078, 120000.0
        %v1154 = vsel %vm329, %v1079, 120000.0
        %v1155 = vsel %vm330, %v1080, 120000.0
        %v1156 = vsel %vm331, %v1081, 120000.0
        %v1157 = vsel %vm332, %v1082, 120000.0
        %v1158 = vsel %vm333, %v1083, 120000.0
        %v1159 = vsel %vm334, %v1084, 120000.0
        %v1160 = vsel %vm335, %v1085, 120000.0
        %v1161 = vsel %vm336, %v1086, 120000.0
        %v1162 = vsel %vm337, %v1087, 120000.0
        %v1163 = vsel %vm338, %v1088, 120000.0
        %v1164 = vsel %vm339, %v1089, 120000.0
        %v1165 = vsel %vm340, %v1090, 120000.0
        %v1166 = vsel %vm341, %v1091, 120000.0
        %v1167 = vsel %vm342, %v1092, 120000.0
        %v1168 = vsel %vm343, %v1093, 120000.0
        %v1169 = vsel %vm344, %v1094, 120000.0
        %v1170 = vsel %vm345, %v1095, 120000.0
        %v1171 = vsel %vm346, %v1096, 120000.0
        %v1172 = vsel %vm347, %v1097, 120000.0
        %v1173 = vsel %vm348, %v1098, 120000.0
        %v1174 = vsel %vm349, %v1099, 120000.0
        %v1175 = vsel %vm350, %v1100, 120000.0
        %v1176 = vsel %vm351, %v1101, 120000.0
        %v1177 = vsel %vm352, %v1102, 120000.0
        %v1178 = vsel %vm353, %v1103, 120000.0
        %v1179 = vsel %vm354, %v1104, 120000.0
        %v1180 = vsel %vm355, %v1105, 120000.0
        %v1181 = vsel %vm356, %v1106, 120000.0
        %v1182 = vsel %vm357, %v1107, 120000.0
        %v1183 = vsel %vm358, %v1108, 120000.0
        %v1184 = vsel %vm359, %v1109, 120000.0
        %v1185 = vsel %vm360, %v1110, 120000.0
        %v1186 = vsel %vm361, %v1111, 120000.0
        %v1187 = vsel %vm362, %v1112, 120000.0
        %v1188 = vsel %vm363, %v1113, 120000.0
        %v1189 = vsel %vm364, %v1114, 120000.0
        %v1190 = vsel %vm365, %v1115, 120000.0
        %v1191 = vsel %vm366, %v1116, 120000.0
        %v1192 = vsel %vm367, %v1117, 120000.0
        %v1193 = vsel %vm368, %v1118, 120000.0
        %v1194 = vsel %vm369, %v1119, 120000.0
        %v1195 = vsel %vm370, %v1120, 120000.0
        %v1196 = vsel %vm371, %v1121, 120000.0
        %v1197 = vsel %vm372, %v1122, 120000.0
        %v1198 = vsel %vm373, %v1123, 120000.0
        %v1199 = vsel %vm374, %v1124, 120000.0
        %v1200 = vsel %vm375, %v1125, 120000.0
        %v1201 = vsel %vm376, %v1126, 120000.0
        %v1202 = vsel %vm377, %v1127, 120000.0
        %v1203 = vsel %vm378, %v1128, 120000.0
        %v1204 = vsel %vm379, %v1129, 120000.0
        %v1205 = vsel %vm380, %v1130, 120000.0
        %v1206 = vsel %vm381, %v1131, 120000.0
        %1207 = vst [vmem:[%s135] sm:$0xff] %v1132
        %1208 = vst [vmem:[%s135 + $0x8] sm:$0xff] %v1133
        %1209 = vst [vmem:[%s135 + $0x10] sm:$0xff] %v1134
        %1210 = vst [vmem:[%s135 + $0x18] sm:$0xff] %v1135
        %1211 = vst [vmem:[%s135 + $0x20] sm:$0xff] %v1136
        %1212 = vst [vmem:[%s135 + $0x28] sm:$0xff] %v1137
        %1213 = vst [vmem:[%s135 + $0x30] sm:$0xff] %v1138
        %1214 = vst [vmem:[%s135 + $0x38] sm:$0xff] %v1139
        %1215 = vst [vmem:[%s135 + $0x40] sm:$0xff] %v1140
        %1216 = vst [vmem:[%s135 + $0x48] sm:$0xff] %v1141
        %1217 = vst [vmem:[%s135 + $0x50] sm:$0xff] %v1142
        %1218 = vst [vmem:[%s135 + $0x58] sm:$0xff] %v1143
        %1219 = vst [vmem:[%s135 + $0x60] sm:$0xff] %v1144
        %1220 = vst [vmem:[%s135 + $0x68] sm:$0xff] %v1145
        %1221 = vst [vmem:[%s135 + $0x70] sm:$0xff] %v1146
        %1222 = vst [vmem:[%s135 + $0x78] sm:$0xff] %v1147
        %1223 = vst [vmem:[%s135 + $0x80] sm:$0xff] %v1148
        %1224 = vst [vmem:[%s135 + $0x88] sm:$0xff] %v1149
        %1225 = vst [vmem:[%s135 + $0x90] sm:$0xff] %v1150
        %1226 = vst [vmem:[%s135 + $0x98] sm:$0xff] %v1151
        %1227 = vst [vmem:[%s135 + $0xa0] sm:$0xff] %v1152
        %1228 = vst [vmem:[%s135 + $0xa8] sm:$0xff] %v1153
        %1229 = vst [vmem:[%s135 + $0xb0] sm:$0xff] %v1154
        %1230 = vst [vmem:[%s135 + $0xb8] sm:$0xff] %v1155
        %1231 = vst [vmem:[%s135 + $0xc0] sm:$0xff] %v1156
        %1232 = vst [vmem:[%s135 + $0xc8] sm:$0xff] %v1157
        %1233 = vst [vmem:[%s135 + $0xd0] sm:$0xff] %v1158
        %1234 = vst [vmem:[%s135 + $0xd8] sm:$0xff] %v1159
        %1235 = vst [vmem:[%s135 + $0xe0] sm:$0xff] %v1160
        %1236 = vst [vmem:[%s135 + $0xe8] sm:$0xff] %v1161
        %1237 = vst [vmem:[%s135 + $0xf0] sm:$0xff] %v1162
        %1238 = vst [vmem:[%s135 + $0xf8] sm:$0xff] %v1163
        %1239 = vst [vmem:[%s135 + $0x100] sm:$0xff] %v1164
        %1240 = vst [vmem:[%s135 + $0x108] sm:$0xff] %v1165
        %1241 = vst [vmem:[%s135 + $0x110] sm:$0xff] %v1166
        %1242 = vst [vmem:[%s135 + $0x118] sm:$0xff] %v1167
        %1243 = vst [vmem:[%s135 + $0x120] sm:$0xff] %v1168
        %1244 = vst [vmem:[%s135 + $0x128] sm:$0xff] %v1169
        %1245 = vst [vmem:[%s135 + $0x130] sm:$0xff] %v1170
        %1246 = vst [vmem:[%s135 + $0x138] sm:$0xff] %v1171
        %1247 = vst [vmem:[%s135 + $0x140] sm:$0xff] %v1172
        %1248 = vst [vmem:[%s135 + $0x148] sm:$0xff] %v1173
        %1249 = vst [vmem:[%s135 + $0x150] sm:$0xff] %v1174
        %1250 = vst [vmem:[%s135 + $0x158] sm:$0xff] %v1175
        %1251 = vst [vmem:[%s135 + $0x160] sm:$0xff] %v1176
        %1252 = vst [vmem:[%s135 + $0x168] sm:$0xff] %v1177
        %1253 = vst [vmem:[%s135 + $0x170] sm:$0xff] %v1178
        %1254 = vst [vmem:[%s135 + $0x178] sm:$0xff] %v1179
        %1255 = vst [vmem:[%s135 + $0x180] sm:$0xff] %v1180
        %1256 = vst [vmem:[%s135 + $0x188] sm:$0xff] %v1181
        %1257 = vst [vmem:[%s135 + $0x190] sm:$0xff] %v1182
        %1258 = vst [vmem:[%s135 + $0x198] sm:$0xff] %v1183
        %1259 = vst [vmem:[%s135 + $0x1a0] sm:$0xff] %v1184
        %1260 = vst [vmem:[%s135 + $0x1a8] sm:$0xff] %v1185
        %1261 = vst [vmem:[%s135 + $0x1b0] sm:$0xff] %v1186
        %1262 = vst [vmem:[%s135 + $0x1b8] sm:$0xff] %v1187
        %1263 = vst [vmem:[%s135 + $0x1c0] sm:$0xff] %v1188
        %1264 = vst [vmem:[%s135 + $0x1c8] sm:$0xff] %v1189
        %1265 = vst [vmem:[%s135 + $0x1d0] sm:$0xff] %v1190
        %1266 = vst [vmem:[%s135 + $0x1d8] sm:$0xff] %v1191
        %1267 = vst [vmem:[%s135 + $0x1e0] sm:$0xff] %v1192
        %1268 = vst [vmem:[%s135 + $0x1e8] sm:$0xff] %v1193
        %1269 = vst [vmem:[%s135 + $0x1f0] sm:$0xff] %v1194
        %1270 = vst [vmem:[%s135 + $0x1f8] sm:$0xff] %v1195
        %1271 = vst [vmem:[%s135 + $0x200] sm:$0xff] %v1196
        %1272 = vst [vmem:[%s135 + $0x208] sm:$0xff] %v1197
        %1273 = vst [vmem:[%s135 + $0x210] sm:$0xff] %v1198
        %1274 = vst [vmem:[%s135 + $0x218] sm:$0xff] %v1199
        %1275 = vst [vmem:[%s135 + $0x220] sm:$0xff] %v1200
        %1276 = vst [vmem:[%s135 + $0x228] sm:$0xff] %v1201
        %1277 = vst [vmem:[%s135 + $0x230] sm:$0xff] %v1202
        %1278 = vst [vmem:[%s135 + $0x238] sm:$0xff] %v1203
        %1279 = vst [vmem:[%s135 + $0x240] sm:$0xff] %v1204
        %1280 = vst [vmem:[%s135 + $0x248] sm:$0xff] %v1205
        %1281 = vst [vmem:[%s135 + $0x250] sm:$0xff] %v1206
        %s1282 = sand.u32 %s52, 1
        %s1283 = scalar_lea.sflag [#allocation4], %s1282
        %s1284 = sand.u32 %s52, 1
        %s1285 = smul.addr %s1284, 600
        %s1286 = scalar_lea.vmem [#allocation5], %s1285
        // Predicated region
        $region29: #{tpu_custom_call.1} parent=23 // pred_check
          %p1287 = pneg %p62
        $region30: #{tpu_custom_call.1} parent=23 // pred_check_branch
          %1289 = sbr.rel (%p1287) target = $region32
        $region31: #{tpu_custom_call.1} parent=23 // pred_region
          %s1290 = smul.u32 15, %s18
          %s1292 = ssub.s32 9600, 9600
          %1293 = vsyncadd %s1283, %s1292
          %s1294 = smul.addr %s1290, 5
          %s1295 = smul.addr %s1294, 128
          %s1296 = scalar_lea.hbm %s1, %s1295
          %s1297 = sshll.u32 %s1286, 4
          %s1298 = int_to_ptr.vmem [resolvable:$true] %s1297
          %1303 = dma.vmem_to_hbm [thread:$0]  %s1298, 9600, %s1296, %s1283, 640, 640, 40
        $region32: #{tpu_custom_call.1} parent=23 // pred_fallthru
          _
      $region24: #{tpu_custom_call.1} parent=5 // pred_fallthru
        _
      %p1304 = scmp.le.s32.totalorder 2, %s13
      // Predicated region
      $region33: #{tpu_custom_call.1} parent=5 // pred_check
        %p1305 = pneg %p1304
      $region34: #{tpu_custom_call.1} parent=5 // pred_check_branch
        %1307 = sbr.rel (%p1305) target = $region36
      $region35: #{tpu_custom_call.1} parent=5 // pred_region
        %s1308 = ssub.s32 %s13, 2
        // Predicated region
        $region37: #{tpu_custom_call.1} parent=35 // pred_check
          %p1309 = pneg %p68
        $region38: #{tpu_custom_call.1} parent=35 // pred_check_branch
          %1311 = sbr.rel (%p1309) target = $region40
        $region39: #{tpu_custom_call.1} parent=35 // pred_region
          %s1312 = sand.u32 %s53, 1
          %s1313 = scalar_lea.sflag [#allocation4], %s1312
          %s1314 = sand.u32 %s53, 1
          %s1315 = smul.addr %s1314, 600
          %s1316 = scalar_lea.vmem [#allocation5], %s1315
          %1317 = dma.done %s1313, 9600
        $region40: #{tpu_custom_call.1} parent=35 // pred_fallthru
          _
      $region36: #{tpu_custom_call.1} parent=5 // pred_fallthru
        _
    $region6: #{tpu_custom_call.1} parent=1 // loop_footer
      %s17 = sadd.s32 1, %s13
    $region7: #{tpu_custom_call.1} parent=1 // loop_footer_branch
      %12 = sbr.rel target = $region3
    $region8: #{tpu_custom_call.1} parent=1 // loop_exit
      _
    %1318 = vsyncpa [#allocation3], 1
    %s1319 = scalar_lea.sflag [#allocation3], 1
    %1320 = vsyncpa %s1319, 1
    %1321 = vsyncpa [#allocation4], 1
    %s1322 = scalar_lea.sflag [#allocation4], 1
    %1323 = vsyncpa %s1322, 1

</llo_original>
